<compile_context>
chip_gen: v5e
topology: v5e:2x2
jax: 0.10.0
libtpu: 0.0.40
codegen_flags: <defaults>
</compile_context>

<pallas_src>
import functools

import jax
import jax.numpy as jnp
from jax.experimental import pallas as pl
from jax.experimental.pallas import tpu as pltpu

_LANES = 128
_MIB = 1024 * 1024


def _swish_kernel(x_ref, o_ref, *, approx: bool):
    xf = x_ref[...].astype(jnp.float32)
    if approx:
        # exp -> EUP, approx reciprocal -> EUP: keeps the divide off the VALU.
        sig = pl.reciprocal(1.0 + jnp.exp(-xf), approx=True)
    else:
        sig = jax.nn.sigmoid(xf)
    o_ref[...] = (xf * sig).astype(o_ref.dtype)


def _vmem_capacity_bytes() -> int:
    """Best-effort per-core VMEM capacity query with a conservative fallback."""
    try:
        info = pltpu.get_tpu_info()
        cap = getattr(info, "vmem_capacity_bytes", None)
        if cap:
            return int(cap)
    except Exception:
        pass
    return 64 * _MIB  # conservative: v7x per-TC budget


def _choose_block_rows(rows: int, itemsize: int, target_bytes: int):
    """Lane-dense block of ~target_bytes, multiple of the packed-sublane tile."""
    sub = max(8, 32 // itemsize)  # 8 for f32, 16 for bf16, 32 for int8/fp8
    if rows <= sub:
        return int(rows), sub  # single block equal to the full array dim
    br = max(sub, (target_bytes // (_LANES * itemsize)) // sub * sub)
    br = min(br, (rows // sub) * sub)  # <= array extent (ragged last block is masked)
    # Guarantee >= 2 grid steps so both v7x TensorCores get work.
    half = pl.cdiv(pl.cdiv(rows, 2), sub) * sub
    br = min(br, max(sub, half))
    return int(br), sub


def _swish_2d(x2d: jax.Array, approx: bool) -> jax.Array:
    rows, _ = x2d.shape
    itemsize = jnp.dtype(x2d.dtype).itemsize

    vmem_cap = _vmem_capacity_bytes()
    # ~5.3 MiB/buffer on 64 MiB VMEM (v7x), ~10.7 MiB on 128 MiB (v5e/v6e).
    target_bytes = min(12 * _MIB, max(4 * _MIB, vmem_cap // 12))
    block_rows, _ = _choose_block_rows(rows, itemsize, target_bytes)

    block_bytes = block_rows * _LANES * itemsize
    vmem_limit = max(32 * _MIB, 4 * block_bytes + 2 * _MIB)  # in+out double-buffered
    vmem_limit = int(min(vmem_limit, (vmem_cap * 3) // 4))

    grid = (pl.cdiv(rows, block_rows),)  # Pallas masks the ragged last block.

    return pl.pallas_call(
        functools.partial(_swish_kernel, approx=approx),
        out_shape=jax.ShapeDtypeStruct((rows, _LANES), x2d.dtype),
        grid_spec=pltpu.PrefetchScalarGridSpec(
            num_scalar_prefetch=0,
            grid=grid,
            in_specs=[pl.BlockSpec((block_rows, _LANES), lambda i: (i, 0))],
            out_specs=pl.BlockSpec((block_rows, _LANES), lambda i: (i, 0)),
        ),
        compiler_params=pltpu.CompilerParams(
            dimension_semantics=("parallel",),  # megacore / v7x 2-TC sharding
            vmem_limit_bytes=vmem_limit,
        ),
    )(x2d)


def swish(x: jax.Array, *, approx: bool = True) -> jax.Array:
    """Elementwise x * sigmoid(x); same shape & dtype as the input."""
    orig_shape, orig_dtype = x.shape, x.dtype
    n = x.size
    if n == 0:
        return x

    x_flat = jnp.ravel(x)
    rem = n % _LANES
    n_aligned = n - rem

    if n_aligned == 0:
        # Tiny (<128 elements): not worth a kernel launch.
        xf = x_flat.astype(jnp.float32)
        return (xf * jax.nn.sigmoid(xf)).astype(orig_dtype).reshape(orig_shape)

    if rem == 0:
        # Fast path (typical NN activations): fully lane-aligned, zero-copy.
        x2d = x_flat.reshape(n // _LANES, _LANES)
        return _swish_2d(x2d, approx).reshape(orig_shape)

    # Ragged size: kernel on the lane-aligned prefix, plain jnp on the
    # <128-element tail. Avoids a full-array pad + slice HBM round trip.
    prefix = jax.lax.slice(x_flat, (0,), (n_aligned,)).reshape(n_aligned // _LANES, _LANES)
    tail = jax.lax.slice(x_flat, (n_aligned,), (n,))
    head_out = _swish_2d(prefix, approx).reshape(-1)
    tail_f = tail.astype(jnp.float32)
    tail_out = (tail_f * jax.nn.sigmoid(tail_f)).astype(orig_dtype)
    return jnp.concatenate([head_out, tail_out]).reshape(orig_shape)


if __name__ == "__main__":
    key = jax.random.PRNGKey(0)
    # NCHW-like small shape consistent with Swish's (N, *) contract.
    x = jax.random.normal(key, (2, 4, 16, 16), dtype=jnp.float32)

    y = swish(x)                        # fast EUP-reciprocal path
    y_strict = swish(x, approx=False)   # bit-accurate sigmoid path
    jax.block_until_ready((y, y_strict))

    y_ref = x * jax.nn.sigmoid(x)
    assert y.shape == x.shape and y.dtype == x.dtype
    # Approx EUP reciprocal is ~2^-12 relative accuracy -> relaxed tolerance.
    assert jnp.allclose(y, y_ref, atol=5e-2, rtol=5e-2)
    # Strict path must match the f32 reference tightly.
    assert jnp.allclose(y_strict, y_ref, atol=1e-6, rtol=1e-6)

    print("KERNEL_OK")
</pallas_src>

<mosaic_0001>
module attributes {stable_mosaic.version = 11 : i64} {
  func.func @_swish_kernel(%arg0: i32, %arg1: memref<8x128xf32, #tpu.memory_space<vmem>>, %arg2: memref<8x128xf32, #tpu.memory_space<vmem>>) attributes {dimension_semantics = [#tpu.dimension_semantics<parallel>], iteration_bounds = array<i64: 2>, scalar_prefetch = 0 : i64, scratch_operands = 0 : i64, tpu.core_type = #tpu.core_type<tc>, window_params = [{transform_indices = @transform_0, window_bounds = array<i64: 8, 128>}, {transform_indices = @transform_1, window_bounds = array<i64: 8, 128>}]} {
    %c0 = arith.constant 0 : index
    %c0_0 = arith.constant 0 : index
    %0 = vector.load %arg1[%c0, %c0_0] : memref<8x128xf32, #tpu.memory_space<vmem>>, vector<8x128xf32>
    %cst = arith.constant 0.000000e+00 : f32
    %1 = vector.broadcast %cst : f32 to vector<8x128xf32>
    %2 = arith.subf %1, %0 : vector<8x128xf32>
    %3 = math.exp %2 : vector<8x128xf32>
    %cst_1 = arith.constant 1.000000e+00 : f32
    %4 = vector.broadcast %cst_1 : f32 to vector<8x128xf32>
    %5 = arith.addf %4, %3 : vector<8x128xf32>
    %6 = tpu.reciprocal %5 {approx = true} : vector<8x128xf32> -> vector<8x128xf32>
    %7 = arith.mulf %0, %6 : vector<8x128xf32>
    %c0_2 = arith.constant 0 : index
    %c0_3 = arith.constant 0 : index
    %8 = vector.load %arg2[%c0_2, %c0_3] : memref<8x128xf32, #tpu.memory_space<vmem>>, vector<8x128xf32>
    tpu.vector_store %arg2[%c0_2, %c0_3], %7 {strides = array<i32>} : memref<8x128xf32, #tpu.memory_space<vmem>>, vector<8x128xf32>,
    return
  }
  func.func @transform_0(%arg0: i32) -> (i32, i32) {
    %c0_i32 = arith.constant 0 : i32
    %c0_i32_0 = arith.constant 0 : i32
    return %arg0, %c0_i32 : i32, i32
  }
  func.func @transform_1(%arg0: i32) -> (i32, i32) {
    %c0_i32 = arith.constant 0 : i32
    %c0_i32_0 = arith.constant 0 : i32
    return %arg0, %c0_i32 : i32, i32
  }
}

</mosaic_0001>

<llo_original>
// kernel: tpu_custom_call.1
$region0: #{tpu_custom_call.1}
  #allocation0 [shape = 'u32[]', space=smem, size = 0x4, offset = 0x4, fixed_abs, tag = 'smem constant byte address 0x4 - core index']
  #allocation1 [shape = 'u32[72,128]{1,0:T(1,128)}', space=vmem, size = 0x9000, scoped, tag = 'internal scratch']
  %s0 = inlined_call_operand.hbm [shape: f32[16,128], index: 0, kind: input, shape index: {}]
  %s1 = inlined_call_operand.hbm [shape: f32[16,128], index: 1, kind: output, shape index: {}]
  %s2 = sld [smem:[#allocation0]]
  $region41: #{tpu_custom_call.1} parent=0
    _
  %s4 = ssub.s32 1, %s2
  %s5 = scalar_select 0, %s4, %s2
  $region1: #{tpu_custom_call.1} parent=0
    #allocation2 [shape = 'u8[8192]{0}', space=vmem, size = 0x2000, scoped, tag = 'input window, operand 0']
    #allocation3 [shape = 's32[2]{0}', space=sflag, size = 0x8, scoped, tag = 'scoped memory for tpu_custom_call.1']
    #allocation4 [shape = 's32[2]{0}', space=sflag, size = 0x8, scoped, tag = 'scoped memory for tpu_custom_call.1']
    #allocation5 [shape = 'u8[8192]{0}', space=vmem, size = 0x2000, scoped, tag = 'output window, operand 0']
    %6 = vsyncpa [#allocation3], 0
    %s7 = scalar_lea.sflag [#allocation3], 1
    %8 = vsyncpa %s7, 0
    %9 = vsyncpa [#allocation4], 0
    %s10 = scalar_lea.sflag [#allocation4], 1
    %11 = vsyncpa %s10, 0
    loop: start=0, step=1, limit=4
    $region2: #{tpu_custom_call.1} parent=1 // loop_pre_header
      _
    $region3: #{tpu_custom_call.1} parent=1 // loop_header
      %s13 = sphi 0, %s17
      %p14 = scmp.ge.s32.totalorder %s13, 4
      %s23 = sphi 0, %s25
      %s26 = sphi 0, %s23
      %s27 = sphi 0, %s26
      %s43 = sphi 0, %s27
      %s49 = sphi 0, %s51
      %s52 = sphi 0, %s49
      %s53 = sphi 0, %s52
      %s69 = sphi 0, %s53
    $region4: #{tpu_custom_call.1} parent=1 // loop_header_branch
      %16 = sbr.rel (%p14) target = $region8
    $region5: #{tpu_custom_call.1} parent=1 // loop_body
      %s18 = ssub.s32 %s13, 1
      %s19 = ssub.s32 %s13, 2
      %s20 = sadd.s32 %s13, 1
      %s21 = ssub.s32 %s13, %s20
      %p22 = scmp.eq.s32.totalorder %s21, 0
      %s24 = sadd.s32 %s23, 1
      %s25 = scalar_select %p22, %s23, %s24
      %p28 = pneg %p22
      %p29 = scmp.eq.s32.totalorder %s13, 1
      %p30 = por %p28, %p29
      %p31 = scmp.ne.s32.totalorder %s23, %s26
      %p32 = scmp.eq.s32.totalorder %s13, 0
      %p33 = por %p31, %p32
      %p34 = scmp.ne.s32.totalorder %s23, %s26
      %p35 = scmp.eq.s32.totalorder %s18, 1
      %p36 = por %p34, %p35
      %p37 = scmp.ne.s32.totalorder %s26, %s27
      %p38 = scmp.eq.s32.totalorder %s18, 0
      %p39 = por %p37, %p38
      %p40 = scmp.ne.s32.totalorder %s26, %s27
      %p41 = scmp.eq.s32.totalorder %s19, 1
      %p42 = por %p40, %p41
      %p44 = scmp.ne.s32.totalorder %s27, %s43
      %p45 = scmp.eq.s32.totalorder %s19, 0
      %p46 = por %p44, %p45
      %s47 = ssub.s32 %s13, %s20
      %p48 = scmp.eq.s32.totalorder %s47, 0
      %s50 = sadd.s32 %s49, 1
      %s51 = scalar_select %p48, %s49, %s50
      %p54 = pneg %p48
      %p55 = scmp.eq.s32.totalorder %s13, 1
      %p56 = por %p54, %p55
      %p57 = scmp.ne.s32.totalorder %s49, %s52
      %p58 = scmp.eq.s32.totalorder %s13, 0
      %p59 = por %p57, %p58
      %p60 = scmp.ne.s32.totalorder %s49, %s52
      %p61 = scmp.eq.s32.totalorder %s18, 1
      %p62 = por %p60, %p61
      %p63 = scmp.ne.s32.totalorder %s52, %s53
      %p64 = scmp.eq.s32.totalorder %s18, 0
      %p65 = por %p63, %p64
      %p66 = scmp.ne.s32.totalorder %s52, %s53
      %p67 = scmp.eq.s32.totalorder %s19, 1
      %p68 = por %p66, %p67
      %p70 = scmp.ne.s32.totalorder %s53, %s69
      %p71 = scmp.eq.s32.totalorder %s19, 0
      %p72 = por %p70, %p71
      %p73 = scmp.le.s32.totalorder 1, %s13
      %p74 = scmp.lt.s32.totalorder %s13, 3
      %p75 = pnand %p73, %p74
      %p76 = pneg %p75
      // Predicated region
      $region9: #{tpu_custom_call.1} parent=5 // pred_check
        _
      $region10: #{tpu_custom_call.1} parent=5 // pred_check_branch
        %78 = sbr.rel (%p75) target = $region12
      $region11: #{tpu_custom_call.1} parent=5 // pred_region
        %s79 = ssub.s32 %s13, 1
      $region12: #{tpu_custom_call.1} parent=5 // pred_fallthru
        _
      %p80 = scmp.lt.s32.totalorder %s13, 2
      // Predicated region
      $region13: #{tpu_custom_call.1} parent=5 // pred_check
        %p81 = pneg %p80
      $region14: #{tpu_custom_call.1} parent=5 // pred_check_branch
        %83 = sbr.rel (%p81) target = $region16
      $region15: #{tpu_custom_call.1} parent=5 // pred_region
        // Predicated region
        $region17: #{tpu_custom_call.1} parent=15 // pred_check
          %p84 = pneg %p33
        $region18: #{tpu_custom_call.1} parent=15 // pred_check_branch
          %86 = sbr.rel (%p84) target = $region20
        $region19: #{tpu_custom_call.1} parent=15 // pred_region
          %s87 = sand.u32 %s23, 1
          %s88 = scalar_lea.sflag [#allocation3], %s87
          %s89 = sand.u32 %s23, 1
          %s90 = smul.addr %s89, 8
          %s91 = scalar_lea.vmem [#allocation2], %s90
          %93 = vsyncadd %s88, 0
          %s94 = smul.addr %s13, 8
          %s95 = scalar_lea.hbm %s0, %s94
          %s97 = sshll.u32 %s95, 4
          %s98 = int_to_ptr.hbm [resolvable:$true] %s97
          %s99 = sshll.u32 %s91, 4
          %s100 = int_to_ptr.vmem [resolvable:$true] %s99
          %102 = dma.hbm_to_vmem [thread:$0]  %s98, 128, %s100, %s88
        $region20: #{tpu_custom_call.1} parent=15 // pred_fallthru
          _
      $region16: #{tpu_custom_call.1} parent=5 // pred_fallthru
        _
      %p103 = scmp.le.s32.totalorder 1, %s13
      %p104 = scmp.lt.s32.totalorder %s13, 3
      %p105 = pnand %p103, %p104
      %p106 = pneg %p105
      // Predicated region
      $region21: #{tpu_custom_call.1} parent=5 // pred_check
        _
      $region22: #{tpu_custom_call.1} parent=5 // pred_check_branch
        %108 = sbr.rel (%p105) target = $region24
      $region23: #{tpu_custom_call.1} parent=5 // pred_region
        %s109 = ssub.s32 %s13, 1
        %s110 = sand.u32 %s26, 1
        %s111 = scalar_lea.sflag [#allocation3], %s110
        %s112 = sand.u32 %s26, 1
        %s113 = smul.addr %s112, 8
        %s114 = scalar_lea.vmem [#allocation2], %s113
        // Predicated region
        $region25: #{tpu_custom_call.1} parent=23 // pred_check
          %p115 = pneg %p39
        $region26: #{tpu_custom_call.1} parent=23 // pred_check_branch
          %117 = sbr.rel (%p115) target = $region28
        $region27: #{tpu_custom_call.1} parent=23 // pred_region
          %119 = dma.done %s111, 128
        $region28: #{tpu_custom_call.1} parent=23 // pred_fallthru
          _
        %s120 = sand.u32 %s26, 1
        %s121 = scalar_lea.sflag [#allocation3], %s120
        %s122 = sand.u32 %s26, 1
        %s123 = smul.addr %s122, 8
        %s124 = scalar_lea.vmem [#allocation2], %s123
        %p125 = pneg %p39
        %p126 = pneg %p36
        %p127 = pneg %p65
        %p128 = pneg %p62
        %s129 = sand.u32 %s52, 1
        %s130 = scalar_lea.sflag [#allocation4], %s129
        %s131 = sand.u32 %s52, 1
        %s132 = smul.addr %s131, 8
        %s133 = scalar_lea.vmem [#allocation5], %s132
        %v134 = vld [vmem:[%s114] sm:$0xff]
        %v135 = vsub.f32 0.0, %v134
        %v136 = vmul.f32 %v135, 1.442695
        %v137 = vpow.pop %v136
        %v138 = vadd.f32 %v137, 1.0
        %v139 = vrcp.pop %v138
        %v140 = vmul.f32 %v134, %v139
        %141 = vst [vmem:[%s133] sm:$0xff] %v140
        %s142 = sand.u32 %s52, 1
        %s143 = scalar_lea.sflag [#allocation4], %s142
        %s144 = sand.u32 %s52, 1
        %s145 = smul.addr %s144, 8
        %s146 = scalar_lea.vmem [#allocation5], %s145
        // Predicated region
        $region29: #{tpu_custom_call.1} parent=23 // pred_check
          %p147 = pneg %p62
        $region30: #{tpu_custom_call.1} parent=23 // pred_check_branch
          %149 = sbr.rel (%p147) target = $region32
        $region31: #{tpu_custom_call.1} parent=23 // pred_region
          %151 = vsyncadd %s143, 0
          %s152 = smul.addr %s18, 8
          %s153 = scalar_lea.hbm %s1, %s152
          %s155 = sshll.u32 %s146, 4
          %s156 = int_to_ptr.vmem [resolvable:$true] %s155
          %s157 = sshll.u32 %s153, 4
          %s158 = int_to_ptr.hbm [resolvable:$true] %s157
          %160 = dma.vmem_to_hbm [thread:$0]  %s156, 128, %s158, %s143
        $region32: #{tpu_custom_call.1} parent=23 // pred_fallthru
          _
      $region24: #{tpu_custom_call.1} parent=5 // pred_fallthru
        _
      %p161 = scmp.le.s32.totalorder 2, %s13
      // Predicated region
      $region33: #{tpu_custom_call.1} parent=5 // pred_check
        %p162 = pneg %p161
      $region34: #{tpu_custom_call.1} parent=5 // pred_check_branch
        %164 = sbr.rel (%p162) target = $region36
      $region35: #{tpu_custom_call.1} parent=5 // pred_region
        %s165 = ssub.s32 %s13, 2
        // Predicated region
        $region37: #{tpu_custom_call.1} parent=35 // pred_check
          %p166 = pneg %p68
        $region38: #{tpu_custom_call.1} parent=35 // pred_check_branch
          %168 = sbr.rel (%p166) target = $region40
        $region39: #{tpu_custom_call.1} parent=35 // pred_region
          %s169 = sand.u32 %s53, 1
          %s170 = scalar_lea.sflag [#allocation4], %s169
          %s171 = sand.u32 %s53, 1
          %s172 = smul.addr %s171, 8
          %s173 = scalar_lea.vmem [#allocation5], %s172
          %175 = dma.done %s170, 128
        $region40: #{tpu_custom_call.1} parent=35 // pred_fallthru
          _
      $region36: #{tpu_custom_call.1} parent=5 // pred_fallthru
        _
    $region6: #{tpu_custom_call.1} parent=1 // loop_footer
      %s17 = sadd.s32 1, %s13
    $region7: #{tpu_custom_call.1} parent=1 // loop_footer_branch
      %12 = sbr.rel target = $region3
    $region8: #{tpu_custom_call.1} parent=1 // loop_exit
      _
    %176 = vsyncpa [#allocation3], 1
    %s177 = scalar_lea.sflag [#allocation3], 1
    %178 = vsyncpa %s177, 1
    %179 = vsyncpa [#allocation4], 1
    %s180 = scalar_lea.sflag [#allocation4], 1
    %181 = vsyncpa %s180, 1

</llo_original>
